<compile_context>
chip_gen: v6e
topology: v6e:2x2x1
jax: 0.10.0
libtpu: 0.0.40
codegen_flags: <defaults>
</compile_context>

<pallas_src>
import math

import jax
import jax.numpy as jnp
from jax import lax
from jax.experimental import pallas as pl
from jax.experimental.pallas import tpu as pltpu


_INV_SQRT_2PI = 1.0 / math.sqrt(2.0 * math.pi)
_LN3 = math.log(3.0)


def _layernorm(x, gamma, beta, eps=1e-5):
    mean = jnp.mean(x, axis=-1, keepdims=True)
    cent = x - mean
    var = jnp.mean(cent * cent, axis=-1, keepdims=True)
    return cent * lax.rsqrt(var + eps) * gamma + beta


# -----------------------------------------------------------------------------
# Fused kernel: packed QKV/sigma projection + softmax attention + Gaussian
# prior + output projection + residual + norm1 + (1x1conv -> relu -> 1x1conv)
# + residual + norm2.   One grid step per batch element.
# -----------------------------------------------------------------------------
def _encoder_layer_kernel(nd2_ref, x_ref,
                          wqkvs_ref, bqkvs_ref, wo_ref,
                          w1_ref, cb1_ref, w2_ref, dvec_ref,
                          out_ref, series_ref, prior_ref, sigma_ref):
    L = x_ref.shape[1]
    D = x_ref.shape[2]

    xb = x_ref[0]                                   # (L, D) fp32
    xb_bf = xb.astype(jnp.bfloat16)

    # ---- packed projections: one MXU pass for [q | k | v | sigma(+pad)] ----
    proj = jnp.dot(xb_bf, wqkvs_ref[...],
                   preferred_element_type=jnp.float32) + bqkvs_ref[...]
    q = proj[:, 0 * D:1 * D]
    k = proj[:, 1 * D:2 * D]
    v = proj[:, 2 * D:3 * D]
    sig_raw = proj[:, 3 * D:3 * D + 1]              # (L, 1)

    # ---- "series" association: scaled dot-product softmax (fp32 math) ----
    scale = 1.0 / math.sqrt(D)
    scores = lax.dot_general(
        q.astype(jnp.bfloat16), k.astype(jnp.bfloat16),
        (((1,), (1,)), ((), ())),
        preferred_element_type=jnp.float32) * scale            # (L, L)
    m = jnp.max(scores, axis=-1, keepdims=True)
    e = jnp.exp(scores - m)
    inv_l = pl.reciprocal(jnp.sum(e, axis=-1, keepdims=True), approx=True)
    series = e * inv_l                                          # (L, L)

    # ---- "prior" association: Gaussian over |i - j| with learned sigma ----
    sig = jax.nn.sigmoid(sig_raw * 5.0) + 1e-5
    sig = jnp.exp(sig * _LN3) - 1.0                             # pow(3, sig) - 1
    inv_sig = pl.reciprocal(sig, approx=True)                   # EUP, no VALU div
    nd2 = nd2_ref[...]                                          # -0.5 * |i-j|^2
    prior = (_INV_SQRT_2PI * inv_sig) * jnp.exp(nd2 * (inv_sig * inv_sig))
    # NOTE: prior is emitted unnormalized (row-normalization, if required by the
    # association-discrepancy loss, is left to the caller — same as before).

    # lane-dense sigma (1, L): pick the diagonal of broadcast sigma via |i-j|==0
    diag = (nd2 == 0.0).astype(jnp.float32)                     # (L, L)
    sig_ld = jnp.sum(sig * diag, axis=0, keepdims=True)         # (1, L)

    # ---- attention context + output projection ----
    ctx = jnp.dot(series.astype(jnp.bfloat16), v.astype(jnp.bfloat16),
                  preferred_element_type=jnp.float32)           # (L, D)
    bo = dvec_ref[0:1, :]
    new_x = jnp.dot(ctx.astype(jnp.bfloat16), wo_ref[...],
                    preferred_element_type=jnp.float32) + bo

    # ---- residual + norm1 + 1x1-conv FFN + residual + norm2 ----
    cb2 = dvec_ref[1:2, :]
    g1, b1 = dvec_ref[2:3, :], dvec_ref[3:4, :]
    g2, b2 = dvec_ref[4:5, :], dvec_ref[5:6, :]

    x1 = xb + new_x                      # x + dropout(new_x), dropout = identity
    y = _layernorm(x1, g1, b1)           # norm1
    h = jnp.maximum(
        jnp.dot(y.astype(jnp.bfloat16), w1_ref[...],
                preferred_element_type=jnp.float32) + cb1_ref[...], 0.0)
    z = jnp.dot(h.astype(jnp.bfloat16), w2_ref[...],
                preferred_element_type=jnp.float32) + cb2

    out_ref[0] = _layernorm(y + z, g2, b2)                      # norm2
    series_ref[0] = series
    prior_ref[0] = prior
    sigma_ref[0] = sig_ld


# -----------------------------------------------------------------------------
# Wrapper
# -----------------------------------------------------------------------------
def encoder_layer_forward(x, params):
    B, L, D = x.shape
    d_ff = params["conv1_w"].shape[1]

    # ---- pack / cast parameters (cheap; would be pre-packed in production) ----
    wsig_pad = jnp.concatenate(
        [params["wsig"], jnp.zeros((D, D - 1), jnp.float32)], axis=1)
    wqkvs = jnp.concatenate(
        [params["wq"], params["wk"], params["wv"], wsig_pad],
        axis=1).astype(jnp.bfloat16)                            # (D, 4D) bf16
    bsig_pad = jnp.concatenate(
        [params["bsig"], jnp.zeros((1, D - 1), jnp.float32)], axis=1)
    bqkvs = jnp.concatenate(
        [params["bq"], params["bk"], params["bv"], bsig_pad], axis=1)  # (1, 4D)
    dvec = jnp.concatenate(
        [params["bo"], params["conv2_b"],
         params["norm1_g"], params["norm1_b"],
         params["norm2_g"], params["norm2_b"]], axis=0)         # (6, D) fp32
    wo = params["wo"].astype(jnp.bfloat16)
    w1 = params["conv1_w"].astype(jnp.bfloat16)
    w2 = params["conv2_w"].astype(jnp.bfloat16)
    cb1 = params["conv1_b"]

    # batch-independent -0.5*|i-j|^2 table (hoisted out of the kernel body)
    idx = jnp.arange(L, dtype=jnp.float32)
    dist = jnp.abs(idx[:, None] - idx[None, :])
    nd2 = -0.5 * dist * dist                                    # (L, L)

    def full(shape):
        return pl.BlockSpec(shape, lambda b: tuple(0 for _ in shape))

    def per_batch(s1, s2):
        return pl.BlockSpec((1, s1, s2), lambda b: (b, 0, 0))

    out_shapes = (
        jax.ShapeDtypeStruct((B, L, D), jnp.float32),   # encoder output
        jax.ShapeDtypeStruct((B, L, L), jnp.float32),   # series (attn)
        jax.ShapeDtypeStruct((B, L, L), jnp.float32),   # prior (mask)
        jax.ShapeDtypeStruct((B, 1, L), jnp.float32),   # sigma, lane-dense
    )

    out, series, prior, sigma_ld = pl.pallas_call(
        _encoder_layer_kernel,
        out_shape=out_shapes,
        grid=(B,),
        in_specs=[
            full((L, L)),              # -0.5*dist^2
            per_batch(L, D),           # x
            full((D, 4 * D)),          # packed Wq|Wk|Wv|Wsig
            full((1, 4 * D)),          # packed projection biases
            full((D, D)),              # Wo
            full((D, d_ff)),           # conv1 weight (1x1 conv as matmul)
            full((1, d_ff)),           # conv1 bias
            full((d_ff, D)),           # conv2 weight
            full((6, D)),              # bo / conv2_b / norm1 g,b / norm2 g,b
        ],
        out_specs=[
            per_batch(L, D),
            per_batch(L, L),
            per_batch(L, L),
            per_batch(1, L),
        ],
        compiler_params=pltpu.CompilerParams(
            dimension_semantics=("parallel",),
            vmem_limit_bytes=64 * 1024 * 1024),
    )(nd2, x, wqkvs, bqkvs, wo, w1, cb1, w2, dvec)

    sigma = jnp.transpose(sigma_ld, (0, 2, 1))   # back to (B, L, 1) for parity
    return out, series, prior, sigma


# -----------------------------------------------------------------------------
# Deterministic parameter init
# -----------------------------------------------------------------------------
def init_params(key, d_model, d_ff):
    ks = jax.random.split(key, 8)
    s = 0.05
    return {
        # attention projections (acting on the right: x @ W)
        "wq": s * jax.random.normal(ks[0], (d_model, d_model), jnp.float32),
        "bq": jnp.zeros((1, d_model), jnp.float32),
        "wk": s * jax.random.normal(ks[1], (d_model, d_model), jnp.float32),
        "bk": jnp.zeros((1, d_model), jnp.float32),
        "wv": s * jax.random.normal(ks[2], (d_model, d_model), jnp.float32),
        "bv": jnp.zeros((1, d_model), jnp.float32),
        "wsig": s * jax.random.normal(ks[3], (d_model, 1), jnp.float32),
        "bsig": jnp.zeros((1, 1), jnp.float32),
        "wo": s * jax.random.normal(ks[4], (d_model, d_model), jnp.float32),
        "bo": jnp.zeros((1, d_model), jnp.float32),
        # norm1 / norm2 (LayerNorm over d_model)
        "norm1_g": jnp.ones((1, d_model), jnp.float32),
        "norm1_b": jnp.zeros((1, d_model), jnp.float32),
        "norm2_g": jnp.ones((1, d_model), jnp.float32),
        "norm2_b": jnp.zeros((1, d_model), jnp.float32),
        # conv1: Conv1d(d_model -> d_ff, k=1) stored as (d_model, d_ff) for x @ W
        "conv1_w": s * jax.random.normal(ks[5], (d_model, d_ff), jnp.float32),
        "conv1_b": jnp.zeros((1, d_ff), jnp.float32),
        # conv2: Conv1d(d_ff -> d_model, k=1) stored as (d_ff, d_model)
        "conv2_w": s * jax.random.normal(ks[6], (d_ff, d_model), jnp.float32),
        "conv2_b": jnp.zeros((1, d_model), jnp.float32),
    }


if __name__ == "__main__":
    B, L, d_model = 2, 8, 32
    d_ff = 4 * d_model

    key = jax.random.PRNGKey(0)
    kx, kp = jax.random.split(key)
    x = jax.random.normal(kx, (B, L, d_model), jnp.float32)
    params = init_params(kp, d_model, d_ff)

    out, attn, mask, sigma = encoder_layer_forward(x, params)
    jax.block_until_ready((out, attn, mask, sigma))

    assert out.shape == (B, L, d_model)
    assert attn.shape == (B, L, L)
    assert mask.shape == (B, L, L)
    assert sigma.shape == (B, L, 1)
    print("KERNEL_OK")
</pallas_src>

<mosaic_0001>
module attributes {stable_mosaic.version = 11 : i64} {
  func.func @_encoder_layer_kernel(%arg0: i32, %arg1: memref<8x8xf32, #tpu.memory_space<vmem>>, %arg2: memref<1x8x32xf32, #tpu.memory_space<vmem>>, %arg3: memref<32x128xbf16, #tpu.memory_space<vmem>>, %arg4: memref<1x128xf32, #tpu.memory_space<vmem>>, %arg5: memref<32x32xbf16, #tpu.memory_space<vmem>>, %arg6: memref<32x128xbf16, #tpu.memory_space<vmem>>, %arg7: memref<1x128xf32, #tpu.memory_space<vmem>>, %arg8: memref<128x32xbf16, #tpu.memory_space<vmem>>, %arg9: memref<6x32xf32, #tpu.memory_space<vmem>>, %arg10: memref<1x8x32xf32, #tpu.memory_space<vmem>>, %arg11: memref<1x8x8xf32, #tpu.memory_space<vmem>>, %arg12: memref<1x8x8xf32, #tpu.memory_space<vmem>>, %arg13: memref<1x1x8xf32, #tpu.memory_space<vmem>>) attributes {dimension_semantics = [#tpu.dimension_semantics<parallel>], iteration_bounds = array<i64: 2>, scalar_prefetch = 0 : i64, scratch_operands = 0 : i64, tpu.core_type = #tpu.core_type<tc>, window_params = [{pipeline_mode = #tpu.pipeline_mode<synchronous>, transform_indices = @transform_0, window_bounds = array<i64: 8, 8>}, {transform_indices = @transform_1, window_bounds = array<i64: 1, 8, 32>}, {pipeline_mode = #tpu.pipeline_mode<synchronous>, transform_indices = @transform_2, window_bounds = array<i64: 32, 128>}, {pipeline_mode = #tpu.pipeline_mode<synchronous>, transform_indices = @transform_3, window_bounds = array<i64: 1, 128>}, {pipeline_mode = #tpu.pipeline_mode<synchronous>, transform_indices = @transform_4, window_bounds = array<i64: 32, 32>}, {pipeline_mode = #tpu.pipeline_mode<synchronous>, transform_indices = @transform_5, window_bounds = array<i64: 32, 128>}, {pipeline_mode = #tpu.pipeline_mode<synchronous>, transform_indices = @transform_6, window_bounds = array<i64: 1, 128>}, {pipeline_mode = #tpu.pipeline_mode<synchronous>, transform_indices = @transform_7, window_bounds = array<i64: 128, 32>}, {pipeline_mode = #tpu.pipeline_mode<synchronous>, transform_indices = @transform_8, window_bounds = array<i64: 6, 32>}, {transform_indices = @transform_9, window_bounds = array<i64: 1, 8, 32>}, {transform_indices = @transform_10, window_bounds = array<i64: 1, 8, 8>}, {transform_indices = @transform_11, window_bounds = array<i64: 1, 8, 8>}, {transform_indices = @transform_12, window_bounds = array<i64: 1, 1, 8>}]} {
    %c0 = arith.constant 0 : index
    %c0_0 = arith.constant 0 : index
    %c0_1 = arith.constant 0 : index
    %0 = vector.load %arg2[%c0, %c0_0, %c0_1] : memref<1x8x32xf32, #tpu.memory_space<vmem>>, vector<1x8x32xf32>
    %1 = vector.shape_cast %0 : vector<1x8x32xf32> to vector<8x32xf32>
    %2 = arith.truncf %1 : vector<8x32xf32> to vector<8x32xbf16>
    %c0_2 = arith.constant 0 : index
    %c0_3 = arith.constant 0 : index
    %3 = vector.load %arg3[%c0_2, %c0_3] : memref<32x128xbf16, #tpu.memory_space<vmem>>, vector<32x128xbf16>
    %cst = arith.constant dense<0.000000e+00> : vector<8x128xf32>
    %4 = tpu.matmul %2, %3, %cst {dimension_numbers = #tpu.dot_dimension_numbers<[1], [0], [0], [1], [0, 0, 1, 1], [], []>} : vector<8x32xbf16>, vector<32x128xbf16>, vector<8x128xf32> -> vector<8x128xf32>
    %c0_4 = arith.constant 0 : index
    %c0_5 = arith.constant 0 : index
    %5 = vector.load %arg4[%c0_4, %c0_5] : memref<1x128xf32, #tpu.memory_space<vmem>>, vector<1x128xf32>
    %6 = vector.broadcast %5 : vector<1x128xf32> to vector<8x128xf32>
    %7 = arith.addf %4, %6 : vector<8x128xf32>
    %8 = vector.extract_strided_slice %7 {offsets = [0, 0], sizes = [8, 32], strides = [1, 1]} : vector<8x128xf32> to vector<8x32xf32>
    %9 = vector.extract_strided_slice %7 {offsets = [0, 32], sizes = [8, 32], strides = [1, 1]} : vector<8x128xf32> to vector<8x32xf32>
    %10 = vector.extract_strided_slice %7 {offsets = [0, 64], sizes = [8, 32], strides = [1, 1]} : vector<8x128xf32> to vector<8x32xf32>
    %11 = vector.extract_strided_slice %7 {offsets = [0, 96], sizes = [8, 1], strides = [1, 1]} : vector<8x128xf32> to vector<8x1xf32>
    %12 = arith.truncf %8 : vector<8x32xf32> to vector<8x32xbf16>
    %13 = arith.truncf %9 : vector<8x32xf32> to vector<8x32xbf16>
    %cst_6 = arith.constant dense<0.000000e+00> : vector<8x8xf32>
    %14 = tpu.matmul %12, %13, %cst_6 {dimension_numbers = #tpu.dot_dimension_numbers<[1], [1], [0], [0], [0, 0, 1, 0], [], []>} : vector<8x32xbf16>, vector<8x32xbf16>, vector<8x8xf32> -> vector<8x8xf32>
    %cst_7 = arith.constant 0.176776692 : f32
    %15 = vector.broadcast %cst_7 : f32 to vector<8x8xf32>
    %16 = arith.mulf %14, %15 : vector<8x8xf32>
    %cst_8 = arith.constant dense<0xFF800000> : vector<8xf32>
    %17 = vector.multi_reduction <maximumf>, %16, %cst_8 [1] : vector<8x8xf32> to vector<8xf32>
    %18 = vector.shape_cast %17 : vector<8xf32> to vector<8x1xf32>
    %19 = vector.broadcast %18 : vector<8x1xf32> to vector<8x8xf32>
    %20 = arith.subf %16, %19 : vector<8x8xf32>
    %21 = math.exp %20 : vector<8x8xf32>
    %cst_9 = arith.constant dense<0.000000e+00> : vector<8xf32>
    %22 = vector.multi_reduction <add>, %21, %cst_9 [1] : vector<8x8xf32> to vector<8xf32>
    %23 = vector.shape_cast %22 : vector<8xf32> to vector<8x1xf32>
    %24 = tpu.reciprocal %23 {approx = true} : vector<8x1xf32> -> vector<8x1xf32>
    %25 = vector.broadcast %24 : vector<8x1xf32> to vector<8x8xf32>
    %26 = arith.mulf %21, %25 : vector<8x8xf32>
    %cst_10 = arith.constant 5.000000e+00 : f32
    %27 = vector.broadcast %cst_10 : f32 to vector<8x1xf32>
    %28 = arith.mulf %11, %27 : vector<8x1xf32>
    %29 = arith.negf %28 : vector<8x1xf32>
    %30 = math.exp %29 : vector<8x1xf32>
    %cst_11 = arith.constant 1.000000e+00 : f32
    %31 = vector.broadcast %cst_11 : f32 to vector<8x1xf32>
    %32 = arith.addf %31, %30 : vector<8x1xf32>
    %33 = arith.divf %31, %32 : vector<8x1xf32>
    %cst_12 = arith.constant 9.99999974E-6 : f32
    %34 = vector.broadcast %cst_12 : f32 to vector<8x1xf32>
    %35 = arith.addf %33, %34 : vector<8x1xf32>
    %cst_13 = arith.constant 1.09861231 : f32
    %36 = vector.broadcast %cst_13 : f32 to vector<8x1xf32>
    %37 = arith.mulf %35, %36 : vector<8x1xf32>
    %38 = math.exp %37 : vector<8x1xf32>
    %cst_14 = arith.constant 1.000000e+00 : f32
    %39 = vector.broadcast %cst_14 : f32 to vector<8x1xf32>
    %40 = arith.subf %38, %39 : vector<8x1xf32>
    %41 = tpu.reciprocal %40 {approx = true} : vector<8x1xf32> -> vector<8x1xf32>
    %c0_15 = arith.constant 0 : index
    %c0_16 = arith.constant 0 : index
    %42 = vector.load %arg1[%c0_15, %c0_16] : memref<8x8xf32, #tpu.memory_space<vmem>>, vector<8x8xf32>
    %cst_17 = arith.constant 0.398942292 : f32
    %43 = vector.broadcast %cst_17 : f32 to vector<8x1xf32>
    %44 = arith.mulf %43, %41 : vector<8x1xf32>
    %45 = arith.mulf %41, %41 : vector<8x1xf32>
    %46 = vector.broadcast %45 : vector<8x1xf32> to vector<8x8xf32>
    %47 = arith.mulf %42, %46 : vector<8x8xf32>
    %48 = math.exp %47 : vector<8x8xf32>
    %49 = vector.broadcast %44 : vector<8x1xf32> to vector<8x8xf32>
    %50 = arith.mulf %49, %48 : vector<8x8xf32>
    %cst_18 = arith.constant 0.000000e+00 : f32
    %51 = vector.broadcast %cst_18 : f32 to vector<8x8xf32>
    %52 = arith.cmpf oeq, %42, %51 : vector<8x8xf32>
    %53 = arith.extui %52 : vector<8x8xi1> to vector<8x8xi32>
    %54 = arith.sitofp %53 : vector<8x8xi32> to vector<8x8xf32>
    %55 = vector.broadcast %40 : vector<8x1xf32> to vector<8x8xf32>
    %56 = arith.mulf %55, %54 : vector<8x8xf32>
    %cst_19 = arith.constant dense<0.000000e+00> : vector<8xf32>
    %57 = vector.multi_reduction <add>, %56, %cst_19 [0] : vector<8x8xf32> to vector<8xf32>
    %58 = vector.shape_cast %57 : vector<8xf32> to vector<1x8xf32>
    %59 = arith.truncf %26 : vector<8x8xf32> to vector<8x8xbf16>
    %60 = arith.truncf %10 : vector<8x32xf32> to vector<8x32xbf16>
    %cst_20 = arith.constant dense<0.000000e+00> : vector<8x32xf32>
    %61 = tpu.matmul %59, %60, %cst_20 {dimension_numbers = #tpu.dot_dimension_numbers<[1], [0], [0], [1], [0, 0, 1, 1], [], []>} : vector<8x8xbf16>, vector<8x32xbf16>, vector<8x32xf32> -> vector<8x32xf32>
    %c0_21 = arith.constant 0 : index
    %c0_22 = arith.constant 0 : index
    %62 = vector.load %arg9[%c0_21, %c0_22] : memref<6x32xf32, #tpu.memory_space<vmem>>, vector<1x32xf32>
    %63 = arith.truncf %61 : vector<8x32xf32> to vector<8x32xbf16>
    %c0_23 = arith.constant 0 : index
    %c0_24 = arith.constant 0 : index
    %64 = vector.load %arg5[%c0_23, %c0_24] : memref<32x32xbf16, #tpu.memory_space<vmem>>, vector<32x32xbf16>
    %cst_25 = arith.constant dense<0.000000e+00> : vector<8x32xf32>
    %65 = tpu.matmul %63, %64, %cst_25 {dimension_numbers = #tpu.dot_dimension_numbers<[1], [0], [0], [1], [0, 0, 1, 1], [], []>} : vector<8x32xbf16>, vector<32x32xbf16>, vector<8x32xf32> -> vector<8x32xf32>
    %66 = vector.broadcast %62 : vector<1x32xf32> to vector<8x32xf32>
    %67 = arith.addf %65, %66 : vector<8x32xf32>
    %c1 = arith.constant 1 : index
    %c0_26 = arith.constant 0 : index
    %68 = vector.load %arg9[%c1, %c0_26] : memref<6x32xf32, #tpu.memory_space<vmem>>, vector<1x32xf32>
    %c2 = arith.constant 2 : index
    %c0_27 = arith.constant 0 : index
    %69 = vector.load %arg9[%c2, %c0_27] : memref<6x32xf32, #tpu.memory_space<vmem>>, vector<1x32xf32>
    %c3 = arith.constant 3 : index
    %c0_28 = arith.constant 0 : index
    %70 = vector.load %arg9[%c3, %c0_28] : memref<6x32xf32, #tpu.memory_space<vmem>>, vector<1x32xf32>
    %c4 = arith.constant 4 : index
    %c0_29 = arith.constant 0 : index
    %71 = vector.load %arg9[%c4, %c0_29] : memref<6x32xf32, #tpu.memory_space<vmem>>, vector<1x32xf32>
    %c5 = arith.constant 5 : index
    %c0_30 = arith.constant 0 : index
    %72 = vector.load %arg9[%c5, %c0_30] : memref<6x32xf32, #tpu.memory_space<vmem>>, vector<1x32xf32>
    %73 = arith.addf %1, %67 : vector<8x32xf32>
    %cst_31 = arith.constant dense<0.000000e+00> : vector<8xf32>
    %74 = vector.multi_reduction <add>, %73, %cst_31 [1] : vector<8x32xf32> to vector<8xf32>
    %75 = vector.shape_cast %74 : vector<8xf32> to vector<8x1xf32>
    %cst_32 = arith.constant 3.200000e+01 : f32
    %76 = vector.broadcast %cst_32 : f32 to vector<8x1xf32>
    %77 = arith.divf %75, %76 : vector<8x1xf32>
    %78 = vector.broadcast %77 : vector<8x1xf32> to vector<8x32xf32>
    %79 = arith.subf %73, %78 : vector<8x32xf32>
    %80 = arith.mulf %79, %79 : vector<8x32xf32>
    %cst_33 = arith.constant dense<0.000000e+00> : vector<8xf32>
    %81 = vector.multi_reduction <add>, %80, %cst_33 [1] : vector<8x32xf32> to vector<8xf32>
    %82 = vector.shape_cast %81 : vector<8xf32> to vector<8x1xf32>
    %cst_34 = arith.constant 3.200000e+01 : f32
    %83 = vector.broadcast %cst_34 : f32 to vector<8x1xf32>
    %84 = arith.divf %82, %83 : vector<8x1xf32>
    %cst_35 = arith.constant 9.99999974E-6 : f32
    %85 = vector.broadcast %cst_35 : f32 to vector<8x1xf32>
    %86 = arith.addf %84, %85 : vector<8x1xf32>
    %87 = math.rsqrt %86 : vector<8x1xf32>
    %88 = vector.broadcast %87 : vector<8x1xf32> to vector<8x32xf32>
    %89 = arith.mulf %79, %88 : vector<8x32xf32>
    %90 = vector.broadcast %69 : vector<1x32xf32> to vector<8x32xf32>
    %91 = arith.mulf %89, %90 : vector<8x32xf32>
    %92 = vector.broadcast %70 : vector<1x32xf32> to vector<8x32xf32>
    %93 = arith.addf %91, %92 : vector<8x32xf32>
    %94 = arith.truncf %93 : vector<8x32xf32> to vector<8x32xbf16>
    %c0_36 = arith.constant 0 : index
    %c0_37 = arith.constant 0 : index
    %95 = vector.load %arg6[%c0_36, %c0_37] : memref<32x128xbf16, #tpu.memory_space<vmem>>, vector<32x128xbf16>
    %cst_38 = arith.constant dense<0.000000e+00> : vector<8x128xf32>
    %96 = tpu.matmul %94, %95, %cst_38 {dimension_numbers = #tpu.dot_dimension_numbers<[1], [0], [0], [1], [0, 0, 1, 1], [], []>} : vector<8x32xbf16>, vector<32x128xbf16>, vector<8x128xf32> -> vector<8x128xf32>
    %c0_39 = arith.constant 0 : index
    %c0_40 = arith.constant 0 : index
    %97 = vector.load %arg7[%c0_39, %c0_40] : memref<1x128xf32, #tpu.memory_space<vmem>>, vector<1x128xf32>
    %98 = vector.broadcast %97 : vector<1x128xf32> to vector<8x128xf32>
    %99 = arith.addf %96, %98 : vector<8x128xf32>
    %cst_41 = arith.constant 0.000000e+00 : f32
    %100 = vector.broadcast %cst_41 : f32 to vector<8x128xf32>
    %101 = arith.maximumf %99, %100 : vector<8x128xf32>
    %102 = arith.truncf %101 : vector<8x128xf32> to vector<8x128xbf16>
    %c0_42 = arith.constant 0 : index
    %c0_43 = arith.constant 0 : index
    %103 = vector.load %arg8[%c0_42, %c0_43] : memref<128x32xbf16, #tpu.memory_space<vmem>>, vector<128x32xbf16>
    %cst_44 = arith.constant dense<0.000000e+00> : vector<8x32xf32>
    %104 = tpu.matmul %102, %103, %cst_44 {dimension_numbers = #tpu.dot_dimension_numbers<[1], [0], [0], [1], [0, 0, 1, 1], [], []>} : vector<8x128xbf16>, vector<128x32xbf16>, vector<8x32xf32> -> vector<8x32xf32>
    %105 = vector.broadcast %68 : vector<1x32xf32> to vector<8x32xf32>
    %106 = arith.addf %104, %105 : vector<8x32xf32>
    %107 = arith.addf %93, %106 : vector<8x32xf32>
    %cst_45 = arith.constant dense<0.000000e+00> : vector<8xf32>
    %108 = vector.multi_reduction <add>, %107, %cst_45 [1] : vector<8x32xf32> to vector<8xf32>
    %109 = vector.shape_cast %108 : vector<8xf32> to vector<8x1xf32>
    %cst_46 = arith.constant 3.200000e+01 : f32
    %110 = vector.broadcast %cst_46 : f32 to vector<8x1xf32>
    %111 = arith.divf %109, %110 : vector<8x1xf32>
    %112 = vector.broadcast %111 : vector<8x1xf32> to vector<8x32xf32>
    %113 = arith.subf %107, %112 : vector<8x32xf32>
    %114 = arith.mulf %113, %113 : vector<8x32xf32>
    %cst_47 = arith.constant dense<0.000000e+00> : vector<8xf32>
    %115 = vector.multi_reduction <add>, %114, %cst_47 [1] : vector<8x32xf32> to vector<8xf32>
    %116 = vector.shape_cast %115 : vector<8xf32> to vector<8x1xf32>
    %cst_48 = arith.constant 3.200000e+01 : f32
    %117 = vector.broadcast %cst_48 : f32 to vector<8x1xf32>
    %118 = arith.divf %116, %117 : vector<8x1xf32>
    %cst_49 = arith.constant 9.99999974E-6 : f32
    %119 = vector.broadcast %cst_49 : f32 to vector<8x1xf32>
    %120 = arith.addf %118, %119 : vector<8x1xf32>
    %121 = math.rsqrt %120 : vector<8x1xf32>
    %122 = vector.broadcast %121 : vector<8x1xf32> to vector<8x32xf32>
    %123 = arith.mulf %113, %122 : vector<8x32xf32>
    %124 = vector.broadcast %71 : vector<1x32xf32> to vector<8x32xf32>
    %125 = arith.mulf %123, %124 : vector<8x32xf32>
    %126 = vector.broadcast %72 : vector<1x32xf32> to vector<8x32xf32>
    %127 = arith.addf %125, %126 : vector<8x32xf32>
    %c0_50 = arith.constant 0 : index
    %c0_51 = arith.constant 0 : index
    %c0_52 = arith.constant 0 : index
    %128 = vector.load %arg10[%c0_50, %c0_51, %c0_52] : memref<1x8x32xf32, #tpu.memory_space<vmem>>, vector<1x8x32xf32>
    %129 = vector.shape_cast %128 : vector<1x8x32xf32> to vector<8x32xf32>
    %130 = vector.shape_cast %127 : vector<8x32xf32> to vector<1x8x32xf32>
    tpu.vector_store %arg10[%c0_50, %c0_51, %c0_52], %130 {strides = array<i32>} : memref<1x8x32xf32, #tpu.memory_space<vmem>>, vector<1x8x32xf32>,
    %c0_53 = arith.constant 0 : index
    %c0_54 = arith.constant 0 : index
    %c0_55 = arith.constant 0 : index
    %131 = vector.load %arg11[%c0_53, %c0_54, %c0_55] : memref<1x8x8xf32, #tpu.memory_space<vmem>>, vector<1x8x8xf32>
    %132 = vector.shape_cast %131 : vector<1x8x8xf32> to vector<8x8xf32>
    %133 = vector.shape_cast %26 : vector<8x8xf32> to vector<1x8x8xf32>
    tpu.vector_store %arg11[%c0_53, %c0_54, %c0_55], %133 {strides = array<i32>} : memref<1x8x8xf32, #tpu.memory_space<vmem>>, vector<1x8x8xf32>,
    %c0_56 = arith.constant 0 : index
    %c0_57 = arith.constant 0 : index
    %c0_58 = arith.constant 0 : index
    %134 = vector.load %arg12[%c0_56, %c0_57, %c0_58] : memref<1x8x8xf32, #tpu.memory_space<vmem>>, vector<1x8x8xf32>
    %135 = vector.shape_cast %134 : vector<1x8x8xf32> to vector<8x8xf32>
    %136 = vector.shape_cast %50 : vector<8x8xf32> to vector<1x8x8xf32>
    tpu.vector_store %arg12[%c0_56, %c0_57, %c0_58], %136 {strides = array<i32>} : memref<1x8x8xf32, #tpu.memory_space<vmem>>, vector<1x8x8xf32>,
    %c0_59 = arith.constant 0 : index
    %c0_60 = arith.constant 0 : index
    %c0_61 = arith.constant 0 : index
    %137 = vector.load %arg13[%c0_59, %c0_60, %c0_61] : memref<1x1x8xf32, #tpu.memory_space<vmem>>, vector<1x1x8xf32>
    %138 = vector.shape_cast %137 : vector<1x1x8xf32> to vector<1x8xf32>
    %139 = vector.shape_cast %58 : vector<1x8xf32> to vector<1x1x8xf32>
    tpu.vector_store %arg13[%c0_59, %c0_60, %c0_61], %139 {strides = array<i32>} : memref<1x1x8xf32, #tpu.memory_space<vmem>>, vector<1x1x8xf32>,
    return
  }
  func.func @transform_0(%arg0: i32) -> (i32, i32) {
    %c0_i32 = arith.constant 0 : i32
    %c0_i32_0 = arith.constant 0 : i32
    %c0_i32_1 = arith.constant 0 : i32
    return %c0_i32, %c0_i32_0 : i32, i32
  }
  func.func @transform_1(%arg0: i32) -> (i32, i32, i32) {
    %c0_i32 = arith.constant 0 : i32
    %c0_i32_0 = arith.constant 0 : i32
    %c0_i32_1 = arith.constant 0 : i32
    return %arg0, %c0_i32, %c0_i32_0 : i32, i32, i32
  }
  func.func @transform_2(%arg0: i32) -> (i32, i32) {
    %c0_i32 = arith.constant 0 : i32
    %c0_i32_0 = arith.constant 0 : i32
    %c0_i32_1 = arith.constant 0 : i32
    return %c0_i32, %c0_i32_0 : i32, i32
  }
  func.func @transform_3(%arg0: i32) -> (i32, i32) {
    %c0_i32 = arith.constant 0 : i32
    %c0_i32_0 = arith.constant 0 : i32
    %c0_i32_1 = arith.constant 0 : i32
    return %c0_i32, %c0_i32_0 : i32, i32
  }
  func.func @transform_4(%arg0: i32) -> (i32, i32) {
    %c0_i32 = arith.constant 0 : i32
    %c0_i32_0 = arith.constant 0 : i32
    %c0_i32_1 = arith.constant 0 : i32
    return %c0_i32, %c0_i32_0 : i32, i32
  }
  func.func @transform_5(%arg0: i32) -> (i32, i32) {
    %c0_i32 = arith.constant 0 : i32
    %c0_i32_0 = arith.constant 0 : i32
    %c0_i32_1 = arith.constant 0 : i32
    return %c0_i32, %c0_i32_0 : i32, i32
  }
  func.func @transform_6(%arg0: i32) -> (i32, i32) {
    %c0_i32 = arith.constant 0 : i32
    %c0_i32_0 = arith.constant 0 : i32
    %c0_i32_1 = arith.constant 0 : i32
    return %c0_i32, %c0_i32_0 : i32, i32
  }
  func.func @transform_7(%arg0: i32) -> (i32, i32) {
    %c0_i32 = arith.constant 0 : i32
    %c0_i32_0 = arith.constant 0 : i32
    %c0_i32_1 = arith.constant 0 : i32
    return %c0_i32, %c0_i32_0 : i32, i32
  }
  func.func @transform_8(%arg0: i32) -> (i32, i32) {
    %c0_i32 = arith.constant 0 : i32
    %c0_i32_0 = arith.constant 0 : i32
    %c0_i32_1 = arith.constant 0 : i32
    return %c0_i32, %c0_i32_0 : i32, i32
  }
  func.func @transform_9(%arg0: i32) -> (i32, i32, i32) {
    %c0_i32 = arith.constant 0 : i32
    %c0_i32_0 = arith.constant 0 : i32
    %c0_i32_1 = arith.constant 0 : i32
    return %arg0, %c0_i32, %c0_i32_0 : i32, i32, i32
  }
  func.func @transform_10(%arg0: i32) -> (i32, i32, i32) {
    %c0_i32 = arith.constant 0 : i32
    %c0_i32_0 = arith.constant 0 : i32
    %c0_i32_1 = arith.constant 0 : i32
    return %arg0, %c0_i32, %c0_i32_0 : i32, i32, i32
  }
  func.func @transform_11(%arg0: i32) -> (i32, i32, i32) {
    %c0_i32 = arith.constant 0 : i32
    %c0_i32_0 = arith.constant 0 : i32
    %c0_i32_1 = arith.constant 0 : i32
    return %arg0, %c0_i32, %c0_i32_0 : i32, i32, i32
  }
  func.func @transform_12(%arg0: i32) -> (i32, i32, i32) {
    %c0_i32 = arith.constant 0 : i32
    %c0_i32_0 = arith.constant 0 : i32
    %c0_i32_1 = arith.constant 0 : i32
    return %arg0, %c0_i32, %c0_i32_0 : i32, i32, i32
  }
}

</mosaic_0001>

<llo_original>
// kernel: tpu_custom_call.1
$region0: #{tpu_custom_call.1}
  #allocation0 [shape = 'u32[]', space=smem, size = 0x4, offset = 0x4, fixed_abs, tag = 'smem constant byte address 0x4 - core index']
  #allocation1 [shape = 'u32[144,128]{1,0:T(1,128)}', space=vmem, size = 0x12000, scoped, tag = 'internal scratch']
  %s0 = inlined_call_operand.vmem [shape: f32[8,8], index: 0, kind: input, shape index: {}]
  %s1 = inlined_call_operand.vmem [shape: f32[2,8,32], index: 1, kind: input, shape index: {}]
  %s2 = inlined_call_operand.vmem [shape: bf16[32,128], index: 2, kind: input, shape index: {}]
  %s3 = inlined_call_operand.vmem [shape: f32[1,128], index: 3, kind: input, shape index: {}]
  %s4 = inlined_call_operand.vmem [shape: bf16[32,32], index: 4, kind: input, shape index: {}]
  %s5 = inlined_call_operand.vmem [shape: bf16[32,128], index: 5, kind: input, shape index: {}]
  %s6 = inlined_call_operand.vmem [shape: f32[1,128], index: 6, kind: input, shape index: {}]
  %s7 = inlined_call_operand.vmem [shape: bf16[128,32], index: 7, kind: input, shape index: {}]
  %s8 = inlined_call_operand.vmem [shape: f32[6,32], index: 8, kind: input, shape index: {}]
  %s9 = inlined_call_operand.hbm [shape: f32[2,8,32], index: 9, kind: output, shape index: {0}]
  %s10 = inlined_call_operand.hbm [shape: f32[2,8,8], index: 10, kind: output, shape index: {1}]
  %s11 = inlined_call_operand.hbm [shape: f32[2,8,8], index: 11, kind: output, shape index: {2}]
  %s12 = inlined_call_operand.hbm [shape: f32[2,1,8], index: 12, kind: output, shape index: {3}]
  %13 = xla_tuple %s9, %s10, %s11, %s12
  %s14 = sld [smem:[#allocation0]]
  $region93: #{tpu_custom_call.1} parent=0
    _
  %s16 = ssub.s32 1, %s14
  %s17 = scalar_select 0, %s16, %s14
  $region1: #{tpu_custom_call.1} parent=0
    #allocation2 [shape = 'u8[8192]{0}', space=vmem, size = 0x2000, scoped, tag = 'output window, operand 0']
    #allocation3 [shape = 's32[2]{0}', space=sflag, size = 0x8, scoped, tag = 'scoped memory for tpu_custom_call.1']
    #allocation4 [shape = 'u8[8192]{0}', space=vmem, size = 0x2000, scoped, tag = 'output window, operand 1']
    #allocation5 [shape = 's32[2]{0}', space=sflag, size = 0x8, scoped, tag = 'scoped memory for tpu_custom_call.1']
    #allocation6 [shape = 'u8[8192]{0}', space=vmem, size = 0x2000, scoped, tag = 'output window, operand 2']
    #allocation7 [shape = 'u8[1024]{0}', space=vmem, size = 0x400, scoped, tag = 'output window, operand 3']
    #allocation8 [shape = 's32[2]{0}', space=sflag, size = 0x8, scoped, tag = 'scoped memory for tpu_custom_call.1']
    %18 = vsyncpa [#allocation3], 0
    %s19 = scalar_lea.sflag [#allocation3], 1
    %20 = vsyncpa %s19, 0
    %21 = vsyncpa [#allocation5], 0
    %s22 = scalar_lea.sflag [#allocation5], 1
    %23 = vsyncpa %s22, 0
    %24 = vsyncpa [#allocation8], 0
    %s25 = scalar_lea.sflag [#allocation8], 1
    %26 = vsyncpa %s25, 0
    loop: start=0, step=1, limit=4
    $region2: #{tpu_custom_call.1} parent=1 // loop_pre_header
      _
    $region3: #{tpu_custom_call.1} parent=1 // loop_header
      %s28 = sphi 0, %s32
      %p29 = scmp.ge.s32.totalorder %s28, 4
      %s36 = sphi 0, %s36
      %s38 = sphi 0, %s36
      %s39 = sphi 0, %s38
      %s53 = sphi 0, %s39
      %s59 = sphi 0, %s61
      %s62 = sphi 0, %s59
      %s63 = sphi 0, %s62
      %s79 = sphi 0, %s63
      %s83 = sphi 0, %s83
      %s85 = sphi 0, %s83
      %s86 = sphi 0, %s85
      %s100 = sphi 0, %s86
      %s104 = sphi 0, %s104
      %s106 = sphi 0, %s104
      %s107 = sphi 0, %s106
      %s121 = sphi 0, %s107
      %s125 = sphi 0, %s125
      %s127 = sphi 0, %s125
      %s128 = sphi 0, %s127
      %s142 = sphi 0, %s128
      %s146 = sphi 0, %s146
      %s148 = sphi 0, %s146
      %s149 = sphi 0, %s148
      %s163 = sphi 0, %s149
      %s167 = sphi 0, %s167
      %s169 = sphi 0, %s167
      %s170 = sphi 0, %s169
      %s184 = sphi 0, %s170
      %s188 = sphi 0, %s188
      %s190 = sphi 0, %s188
      %s191 = sphi 0, %s190
      %s205 = sphi 0, %s191
      %s209 = sphi 0, %s209
      %s211 = sphi 0, %s209
      %s212 = sphi 0, %s211
      %s226 = sphi 0, %s212
      %s232 = sphi 0, %s234
      %s235 = sphi 0, %s232
      %s236 = sphi 0, %s235
      %s252 = sphi 0, %s236
      %s258 = sphi 0, %s260
      %s261 = sphi 0, %s258
      %s262 = sphi 0, %s261
      %s278 = sphi 0, %s262
      %s284 = sphi 0, %s286
      %s287 = sphi 0, %s284
      %s288 = sphi 0, %s287
      %s304 = sphi 0, %s288
      %s310 = sphi 0, %s312
      %s313 = sphi 0, %s310
      %s314 = sphi 0, %s313
      %s330 = sphi 0, %s314
    $region4: #{tpu_custom_call.1} parent=1 // loop_header_branch
      %31 = sbr.rel (%p29) target = $region8
    $region5: #{tpu_custom_call.1} parent=1 // loop_body
      %s33 = ssub.s32 %s28, 1
      %s34 = ssub.s32 %s28, 2
      %s35 = sadd.s32 %s28, 1
      %s37 = sadd.s32 %s36, 1
      %p40 = scmp.eq.s32.totalorder %s28, 1
      %p41 = scmp.ne.s32.totalorder %s36, %s38
      %p42 = scmp.eq.s32.totalorder %s28, 0
      %p43 = por %p41, %p42
      %p44 = scmp.ne.s32.totalorder %s36, %s38
      %p45 = scmp.eq.s32.totalorder %s33, 1
      %p46 = por %p44, %p45
      %p47 = scmp.ne.s32.totalorder %s38, %s39
      %p48 = scmp.eq.s32.totalorder %s33, 0
      %p49 = por %p47, %p48
      %p50 = scmp.ne.s32.totalorder %s38, %s39
      %p51 = scmp.eq.s32.totalorder %s34, 1
      %p52 = por %p50, %p51
      %p54 = scmp.ne.s32.totalorder %s39, %s53
      %p55 = scmp.eq.s32.totalorder %s34, 0
      %p56 = por %p54, %p55
      %s57 = ssub.s32 %s28, %s35
      %p58 = scmp.eq.s32.totalorder %s57, 0
      %s60 = sadd.s32 %s59, 1
      %s61 = scalar_select %p58, %s59, %s60
      %p64 = pneg %p58
      %p65 = scmp.eq.s32.totalorder %s28, 1
      %p66 = por %p64, %p65
      %p67 = scmp.ne.s32.totalorder %s59, %s62
      %p68 = scmp.eq.s32.totalorder %s28, 0
      %p69 = por %p67, %p68
      %p70 = scmp.ne.s32.totalorder %s59, %s62
      %p71 = scmp.eq.s32.totalorder %s33, 1
      %p72 = por %p70, %p71
      %p73 = scmp.ne.s32.totalorder %s62, %s63
      %p74 = scmp.eq.s32.totalorder %s33, 0
      %p75 = por %p73, %p74
      %p76 = scmp.ne.s32.totalorder %s62, %s63
      %p77 = scmp.eq.s32.totalorder %s34, 1
      %p78 = por %p76, %p77
      %p80 = scmp.ne.s32.totalorder %s63, %s79
      %p81 = scmp.eq.s32.totalorder %s34, 0
      %p82 = por %p80, %p81
      %s84 = sadd.s32 %s83, 1
      %p87 = scmp.eq.s32.totalorder %s28, 1
      %p88 = scmp.ne.s32.totalorder %s83, %s85
      %p89 = scmp.eq.s32.totalorder %s28, 0
      %p90 = por %p88, %p89
      %p91 = scmp.ne.s32.totalorder %s83, %s85
      %p92 = scmp.eq.s32.totalorder %s33, 1
      %p93 = por %p91, %p92
      %p94 = scmp.ne.s32.totalorder %s85, %s86
      %p95 = scmp.eq.s32.totalorder %s33, 0
      %p96 = por %p94, %p95
      %p97 = scmp.ne.s32.totalorder %s85, %s86
      %p98 = scmp.eq.s32.totalorder %s34, 1
      %p99 = por %p97, %p98
      %p101 = scmp.ne.s32.totalorder %s86, %s100
      %p102 = scmp.eq.s32.totalorder %s34, 0
      %p103 = por %p101, %p102
      %s105 = sadd.s32 %s104, 1
      %p108 = scmp.eq.s32.totalorder %s28, 1
      %p109 = scmp.ne.s32.totalorder %s104, %s106
      %p110 = scmp.eq.s32.totalorder %s28, 0
      %p111 = por %p109, %p110
      %p112 = scmp.ne.s32.totalorder %s104, %s106
      %p113 = scmp.eq.s32.totalorder %s33, 1
      %p114 = por %p112, %p113
      %p115 = scmp.ne.s32.totalorder %s106, %s107
      %p116 = scmp.eq.s32.totalorder %s33, 0
      %p117 = por %p115, %p116
      %p118 = scmp.ne.s32.totalorder %s106, %s107
      %p119 = scmp.eq.s32.totalorder %s34, 1
      %p120 = por %p118, %p119
      %p122 = scmp.ne.s32.totalorder %s107, %s121
      %p123 = scmp.eq.s32.totalorder %s34, 0
      %p124 = por %p122, %p123
      %s126 = sadd.s32 %s125, 1
      %p129 = scmp.eq.s32.totalorder %s28, 1
      %p130 = scmp.ne.s32.totalorder %s125, %s127
      %p131 = scmp.eq.s32.totalorder %s28, 0
      %p132 = por %p130, %p131
      %p133 = scmp.ne.s32.totalorder %s125, %s127
      %p134 = scmp.eq.s32.totalorder %s33, 1
      %p135 = por %p133, %p134
      %p136 = scmp.ne.s32.totalorder %s127, %s128
      %p137 = scmp.eq.s32.totalorder %s33, 0
      %p138 = por %p136, %p137
      %p139 = scmp.ne.s32.totalorder %s127, %s128
      %p140 = scmp.eq.s32.totalorder %s34, 1
      %p141 = por %p139, %p140
      %p143 = scmp.ne.s32.totalorder %s128, %s142
      %p144 = scmp.eq.s32.totalorder %s34, 0
      %p145 = por %p143, %p144
      %s147 = sadd.s32 %s146, 1
      %p150 = scmp.eq.s32.totalorder %s28, 1
      %p151 = scmp.ne.s32.totalorder %s146, %s148
      %p152 = scmp.eq.s32.totalorder %s28, 0
      %p153 = por %p151, %p152
      %p154 = scmp.ne.s32.totalorder %s146, %s148
      %p155 = scmp.eq.s32.totalorder %s33, 1
      %p156 = por %p154, %p155
      %p157 = scmp.ne.s32.totalorder %s148, %s149
      %p158 = scmp.eq.s32.totalorder %s33, 0
      %p159 = por %p157, %p158
      %p160 = scmp.ne.s32.totalorder %s148, %s149
      %p161 = scmp.eq.s32.totalorder %s34, 1
      %p162 = por %p160, %p161
      %p164 = scmp.ne.s32.totalorder %s149, %s163
      %p165 = scmp.eq.s32.totalorder %s34, 0
      %p166 = por %p164, %p165
      %s168 = sadd.s32 %s167, 1
      %p171 = scmp.eq.s32.totalorder %s28, 1
      %p172 = scmp.ne.s32.totalorder %s167, %s169
      %p173 = scmp.eq.s32.totalorder %s28, 0
      %p174 = por %p172, %p173
      %p175 = scmp.ne.s32.totalorder %s167, %s169
      %p176 = scmp.eq.s32.totalorder %s33, 1
      %p177 = por %p175, %p176
      %p178 = scmp.ne.s32.totalorder %s169, %s170
      %p179 = scmp.eq.s32.totalorder %s33, 0
      %p180 = por %p178, %p179
      %p181 = scmp.ne.s32.totalorder %s169, %s170
      %p182 = scmp.eq.s32.totalorder %s34, 1
      %p183 = por %p181, %p182
      %p185 = scmp.ne.s32.totalorder %s170, %s184
      %p186 = scmp.eq.s32.totalorder %s34, 0
      %p187 = por %p185, %p186
      %s189 = sadd.s32 %s188, 1
      %p192 = scmp.eq.s32.totalorder %s28, 1
      %p193 = scmp.ne.s32.totalorder %s188, %s190
      %p194 = scmp.eq.s32.totalorder %s28, 0
      %p195 = por %p193, %p194
      %p196 = scmp.ne.s32.totalorder %s188, %s190
      %p197 = scmp.eq.s32.totalorder %s33, 1
      %p198 = por %p196, %p197
      %p199 = scmp.ne.s32.totalorder %s190, %s191
      %p200 = scmp.eq.s32.totalorder %s33, 0
      %p201 = por %p199, %p200
      %p202 = scmp.ne.s32.totalorder %s190, %s191
      %p203 = scmp.eq.s32.totalorder %s34, 1
      %p204 = por %p202, %p203
      %p206 = scmp.ne.s32.totalorder %s191, %s205
      %p207 = scmp.eq.s32.totalorder %s34, 0
      %p208 = por %p206, %p207
      %s210 = sadd.s32 %s209, 1
      %p213 = scmp.eq.s32.totalorder %s28, 1
      %p214 = scmp.ne.s32.totalorder %s209, %s211
      %p215 = scmp.eq.s32.totalorder %s28, 0
      %p216 = por %p214, %p215
      %p217 = scmp.ne.s32.totalorder %s209, %s211
      %p218 = scmp.eq.s32.totalorder %s33, 1
      %p219 = por %p217, %p218
      %p220 = scmp.ne.s32.totalorder %s211, %s212
      %p221 = scmp.eq.s32.totalorder %s33, 0
      %p222 = por %p220, %p221
      %p223 = scmp.ne.s32.totalorder %s211, %s212
      %p224 = scmp.eq.s32.totalorder %s34, 1
      %p225 = por %p223, %p224
      %p227 = scmp.ne.s32.totalorder %s212, %s226
      %p228 = scmp.eq.s32.totalorder %s34, 0
      %p229 = por %p227, %p228
      %s230 = ssub.s32 %s28, %s35
      %p231 = scmp.eq.s32.totalorder %s230, 0
      %s233 = sadd.s32 %s232, 1
      %s234 = scalar_select %p231, %s232, %s233
      %p237 = pneg %p231
      %p238 = scmp.eq.s32.totalorder %s28, 1
      %p239 = por %p237, %p238
      %p240 = scmp.ne.s32.totalorder %s232, %s235
      %p241 = scmp.eq.s32.totalorder %s28, 0
      %p242 = por %p240, %p241
      %p243 = scmp.ne.s32.totalorder %s232, %s235
      %p244 = scmp.eq.s32.totalorder %s33, 1
      %p245 = por %p243, %p244
      %p246 = scmp.ne.s32.totalorder %s235, %s236
      %p247 = scmp.eq.s32.totalorder %s33, 0
      %p248 = por %p246, %p247
      %p249 = scmp.ne.s32.totalorder %s235, %s236
      %p250 = scmp.eq.s32.totalorder %s34, 1
      %p251 = por %p249, %p250
      %p253 = scmp.ne.s32.totalorder %s236, %s252
      %p254 = scmp.eq.s32.totalorder %s34, 0
      %p255 = por %p253, %p254
      %s256 = ssub.s32 %s28, %s35
      %p257 = scmp.eq.s32.totalorder %s256, 0
      %s259 = sadd.s32 %s258, 1
      %s260 = scalar_select %p257, %s258, %s259
      %p263 = pneg %p257
      %p264 = scmp.eq.s32.totalorder %s28, 1
      %p265 = por %p263, %p264
      %p266 = scmp.ne.s32.totalorder %s258, %s261
      %p267 = scmp.eq.s32.totalorder %s28, 0
      %p268 = por %p266, %p267
      %p269 = scmp.ne.s32.totalorder %s258, %s261
      %p270 = scmp.eq.s32.totalorder %s33, 1
      %p271 = por %p269, %p270
      %p272 = scmp.ne.s32.totalorder %s261, %s262
      %p273 = scmp.eq.s32.totalorder %s33, 0
      %p274 = por %p272, %p273
      %p275 = scmp.ne.s32.totalorder %s261, %s262
      %p276 = scmp.eq.s32.totalorder %s34, 1
      %p277 = por %p275, %p276
      %p279 = scmp.ne.s32.totalorder %s262, %s278
      %p280 = scmp.eq.s32.totalorder %s34, 0
      %p281 = por %p279, %p280
      %s282 = ssub.s32 %s28, %s35
      %p283 = scmp.eq.s32.totalorder %s282, 0
      %s285 = sadd.s32 %s284, 1
      %s286 = scalar_select %p283, %s284, %s285
      %p289 = pneg %p283
      %p290 = scmp.eq.s32.totalorder %s28, 1
      %p291 = por %p289, %p290
      %p292 = scmp.ne.s32.totalorder %s284, %s287
      %p293 = scmp.eq.s32.totalorder %s28, 0
      %p294 = por %p292, %p293
      %p295 = scmp.ne.s32.totalorder %s284, %s287
      %p296 = scmp.eq.s32.totalorder %s33, 1
      %p297 = por %p295, %p296
      %p298 = scmp.ne.s32.totalorder %s287, %s288
      %p299 = scmp.eq.s32.totalorder %s33, 0
      %p300 = por %p298, %p299
      %p301 = scmp.ne.s32.totalorder %s287, %s288
      %p302 = scmp.eq.s32.totalorder %s34, 1
      %p303 = por %p301, %p302
      %p305 = scmp.ne.s32.totalorder %s288, %s304
      %p306 = scmp.eq.s32.totalorder %s34, 0
      %p307 = por %p305, %p306
      %s308 = ssub.s32 %s28, %s35
      %p309 = scmp.eq.s32.totalorder %s308, 0
      %s311 = sadd.s32 %s310, 1
      %s312 = scalar_select %p309, %s310, %s311
      %p315 = pneg %p309
      %p316 = scmp.eq.s32.totalorder %s28, 1
      %p317 = por %p315, %p316
      %p318 = scmp.ne.s32.totalorder %s310, %s313
      %p319 = scmp.eq.s32.totalorder %s28, 0
      %p320 = por %p318, %p319
      %p321 = scmp.ne.s32.totalorder %s310, %s313
      %p322 = scmp.eq.s32.totalorder %s33, 1
      %p323 = por %p321, %p322
      %p324 = scmp.ne.s32.totalorder %s313, %s314
      %p325 = scmp.eq.s32.totalorder %s33, 0
      %p326 = por %p324, %p325
      %p327 = scmp.ne.s32.totalorder %s313, %s314
      %p328 = scmp.eq.s32.totalorder %s34, 1
      %p329 = por %p327, %p328
      %p331 = scmp.ne.s32.totalorder %s314, %s330
      %p332 = scmp.eq.s32.totalorder %s34, 0
      %p333 = por %p331, %p332
      %p334 = scmp.le.s32.totalorder 1, %s28
      %p335 = scmp.lt.s32.totalorder %s28, 3
      %p336 = pnand %p334, %p335
      %p337 = pneg %p336
      // Predicated region
      $region9: #{tpu_custom_call.1} parent=5 // pred_check
        _
      $region10: #{tpu_custom_call.1} parent=5 // pred_check_branch
        %339 = sbr.rel (%p336) target = $region12
      $region11: #{tpu_custom_call.1} parent=5 // pred_region
        %s340 = ssub.s32 %s28, 1
        // Predicated region
        $region13: #{tpu_custom_call.1} parent=11 // pred_check
          %p341 = pneg %p49
        $region14: #{tpu_custom_call.1} parent=11 // pred_check_branch
          %343 = sbr.rel (%p341) target = $region16
        $region15: #{tpu_custom_call.1} parent=11 // pred_region
          _
        $region16: #{tpu_custom_call.1} parent=11 // pred_fallthru
          _
        // Predicated region
        $region17: #{tpu_custom_call.1} parent=11 // pred_check
          %p344 = pneg %p96
        $region18: #{tpu_custom_call.1} parent=11 // pred_check_branch
          %346 = sbr.rel (%p344) target = $region20
        $region19: #{tpu_custom_call.1} parent=11 // pred_region
          _
        $region20: #{tpu_custom_call.1} parent=11 // pred_fallthru
          _
        // Predicated region
        $region21: #{tpu_custom_call.1} parent=11 // pred_check
          %p347 = pneg %p117
        $region22: #{tpu_custom_call.1} parent=11 // pred_check_branch
          %349 = sbr.rel (%p347) target = $region24
        $region23: #{tpu_custom_call.1} parent=11 // pred_region
          _
        $region24: #{tpu_custom_call.1} parent=11 // pred_fallthru
          _
        // Predicated region
        $region25: #{tpu_custom_call.1} parent=11 // pred_check
          %p350 = pneg %p138
        $region26: #{tpu_custom_call.1} parent=11 // pred_check_branch
          %352 = sbr.rel (%p350) target = $region28
        $region27: #{tpu_custom_call.1} parent=11 // pred_region
          _
        $region28: #{tpu_custom_call.1} parent=11 // pred_fallthru
          _
        // Predicated region
        $region29: #{tpu_custom_call.1} parent=11 // pred_check
          %p353 = pneg %p159
        $region30: #{tpu_custom_call.1} parent=11 // pred_check_branch
          %355 = sbr.rel (%p353) target = $region32
        $region31: #{tpu_custom_call.1} parent=11 // pred_region
          _
        $region32: #{tpu_custom_call.1} parent=11 // pred_fallthru
          _
        // Predicated region
        $region33: #{tpu_custom_call.1} parent=11 // pred_check
          %p356 = pneg %p180
        $region34: #{tpu_custom_call.1} parent=11 // pred_check_branch
          %358 = sbr.rel (%p356) target = $region36
        $region35: #{tpu_custom_call.1} parent=11 // pred_region
          _
        $region36: #{tpu_custom_call.1} parent=11 // pred_fallthru
          _
        // Predicated region
        $region37: #{tpu_custom_call.1} parent=11 // pred_check
          %p359 = pneg %p201
        $region38: #{tpu_custom_call.1} parent=11 // pred_check_branch
          %361 = sbr.rel (%p359) target = $region40
        $region39: #{tpu_custom_call.1} parent=11 // pred_region
          _
        $region40: #{tpu_custom_call.1} parent=11 // pred_fallthru
          _
        // Predicated region
        $region41: #{tpu_custom_call.1} parent=11 // pred_check
          %p362 = pneg %p222
        $region42: #{tpu_custom_call.1} parent=11 // pred_check_branch
          %364 = sbr.rel (%p362) target = $region44
        $region43: #{tpu_custom_call.1} parent=11 // pred_region
          _
        $region44: #{tpu_custom_call.1} parent=11 // pred_fallthru
          _
      $region12: #{tpu_custom_call.1} parent=5 // pred_fallthru
        _
      %p365 = scmp.lt.s32.totalorder %s28, 2
      // Predicated region
      $region45: #{tpu_custom_call.1} parent=5 // pred_check
        %p366 = pneg %p365
      $region46: #{tpu_custom_call.1} parent=5 // pred_check_branch
        %368 = sbr.rel (%p366) target = $region48
      $region47: #{tpu_custom_call.1} parent=5 // pred_region
        // Predicated region
        $region49: #{tpu_custom_call.1} parent=47 // pred_check
          %p369 = pneg %p69
        $region50: #{tpu_custom_call.1} parent=47 // pred_check_branch
          %371 = sbr.rel (%p369) target = $region52
        $region51: #{tpu_custom_call.1} parent=47 // pred_region
          %p372 = scmp.lt.s32.totalorder %s28, 1
          %s373 = scalar_select %p372, %s28, 1
          %s374 = smul.addr %s373, 8
          %s375 = scalar_lea.vmem %s1, %s374
        $region52: #{tpu_custom_call.1} parent=47 // pred_fallthru
          _
      $region48: #{tpu_custom_call.1} parent=5 // pred_fallthru
        _
      %p376 = scmp.le.s32.totalorder 1, %s28
      %p377 = scmp.lt.s32.totalorder %s28, 3
      %p378 = pnand %p376, %p377
      %p379 = pneg %p378
      // Predicated region
      $region53: #{tpu_custom_call.1} parent=5 // pred_check
        _
      $region54: #{tpu_custom_call.1} parent=5 // pred_check_branch
        %381 = sbr.rel (%p378) target = $region56
      $region55: #{tpu_custom_call.1} parent=5 // pred_region
        %s382 = ssub.s32 %s28, 1
        %p383 = pneg %p49
        %p384 = pneg %p46
        %p385 = scmp.lt.s32.totalorder %s33, 1
        %s386 = scalar_select %p385, %s33, 1
        %s387 = smul.addr %s386, 8
        %s388 = scalar_lea.vmem %s1, %s387
        %p389 = pneg %p75
        %p390 = pneg %p72
        %p391 = pneg %p96
        %p392 = pneg %p93
        %p393 = pneg %p117
        %p394 = pneg %p114
        %p395 = pneg %p138
        %p396 = pneg %p135
        %p397 = pneg %p159
        %p398 = pneg %p156
        %p399 = pneg %p180
        %p400 = pneg %p177
        %p401 = pneg %p201
        %p402 = pneg %p198
        %p403 = pneg %p222
        %p404 = pneg %p219
        %p405 = pneg %p248
        %p406 = pneg %p245
        %s407 = sand.u32 %s235, 1
        %s408 = scalar_lea.sflag [#allocation3], %s407
        %s409 = sand.u32 %s235, 1
        %s410 = smul.addr %s409, 8
        %s411 = scalar_lea.vmem [#allocation2], %s410
        %p412 = pneg %p274
        %p413 = pneg %p271
        %s414 = sand.u32 %s33, 1
        %s415 = scalar_lea.sflag [#allocation5], %s414
        %s416 = sand.u32 %s261, 1
        %s417 = smul.addr %s416, 8
        %s418 = scalar_lea.vmem [#allocation4], %s417
        %p419 = pneg %p300
        %p420 = pneg %p297
        %s421 = sand.u32 %s33, 1
        %s422 = scalar_lea.sflag [#allocation5], %s421
        %s423 = sand.u32 %s287, 1
        %s424 = smul.addr %s423, 8
        %s425 = scalar_lea.vmem [#allocation6], %s424
        %p426 = pneg %p326
        %p427 = pneg %p323
        %s428 = sand.u32 %s313, 1
        %s429 = scalar_lea.sflag [#allocation8], %s428
        %s430 = sand.u32 %s313, 1
        %s431 = scalar_lea.vmem [#allocation7], %s430
        %p432 = scmp.lt.s32.totalorder %s33, 1
        %s433 = scalar_select %p432, %s33, 1
        %s434 = smul.addr %s433, 8
        %s435 = scalar_lea.vmem %s1, %s434
        %v437 = vld [vmem:[%s435] sm:$0xff]
        %v438 = vpack.c.bf16 %v437, %v437
        %v439 = vld [vmem:[%s2] sm:$0xf]
        %v440 = vld [vmem:[%s2 + $0x4] sm:$0xf]
        %v441 = vld [vmem:[%s2 + $0x8] sm:$0xf]
        %v442 = vld [vmem:[%s2 + $0xc] sm:$0xf]
        %v443 = vld [vmem:[%s3] sm:$0x1]
        %v445 = vlaneseq
        %v446 = vshrl.u32 %v445, 7
        %v447 = vsub.s32 0, %v446
        %v448 = vrot.slane %v443, %v447
        %v454 = vunpack.c.l.b16 %v439
        %v455 = vunpack.c.l.b16 %v440
        %v456 = vunpack.c.l.b16 %v441
        %v457 = vunpack.c.l.b16 %v442
        %v458 = vpack.c.b16 %v455, %v454
        %v459 = vpack.c.b16 %v457, %v456
        %vm462 = vcmask 261120
        %v464 = vsel %vm462, %v438, 0
        %466 = vmatprep.subr.bf16.mxu0 0
        %467 = vmatpush1.bf16.msra.mxu0 0
        %468 = vmatprep.subr.bf16.mxu0 0
        %469 = vmatpush1.bf16.msra.mxu0 0
        %470 = vmatprep.subr.bf16.mxu0 0
        %471 = vmatpush1.bf16.msra.mxu0 0
        %472 = vmatprep.subr.bf16.mxu0 0
        %473 = vmatpush1.bf16.msra.mxu0 0
        %474 = vmatprep.subr.bf16.mxu0 0
        %475 = vmatpush1.bf16.msra.mxu0 0
        %476 = vmatprep.subr.bf16.mxu0 0
        %477 = vmatpush1.bf16.msra.mxu0 0
        %478 = vmatprep.subr.bf16.mxu0 0
        %479 = vmatpush1.bf16.msra.mxu0 %v459
        %480 = vmatprep.subr.bf16.mxu0 0
        %481 = vmatpush1.bf16.msra.mxu0 %v458
        %482 = vmatprep.subr.bf16.mxu0 0
        %483 = vmatpush2.bf16.msra.mxu0 0
        %484 = vmatprep.subr.bf16.mxu0 0
        %485 = vmatpush2.bf16.msra.mxu0 0
        %486 = vmatprep.subr.bf16.mxu0 0
        %487 = vmatpush2.bf16.msra.mxu0 0
        %488 = vmatprep.subr.bf16.mxu0 0
        %489 = vmatpush2.bf16.msra.mxu0 0
        %490 = vmatprep.subr.bf16.mxu0 0
        %491 = vmatpush2.bf16.msra.mxu0 0
        %492 = vmatprep.subr.bf16.mxu0 0
        %493 = vmatpush2.bf16.msra.mxu0 0
        %494 = vmatprep.subr.bf16.mxu0 0
        %495 = vmatpush2.bf16.msra.mxu0 0
        %496 = vmatprep.subr.bf16.mxu0 0
        %497 = vmatpush2.bf16.msra.mxu0 0
        %498 = vmatprep.mubr.bf16.mxu0 0
        %499 = vmatmul.mubr.bf16.gmra.mxu0 %v464
        %v500 = vpop.f32.mrf.mxu0
        %v501 = vadd.f32 %v448, %v500
        %v502 = vpop.f32.mrf.mxu0
        %v503 = vpop.f32.mrf.mxu0
        %v504 = vpop.f32.mrf.mxu0
        %505 = vdwg.mxu0
        %v506 = vpack.c.bf16 %v501, %v501
        %508 = vrot.lane.b32.xlu0 %v506, 96
        %v509 = vpop.permute.xlu0 %508
        %v511 = vsel %vm462, %v506, 0
        %v514 = vsel %vm462, %v509, 0
        %516 = vmatprep.subr.bf16.mxu0 0
        %517 = vmatpush1.bf16.xpose.msra.mxu0 0
        %518 = vmatprep.subr.bf16.mxu0 0
        %519 = vmatpush1.bf16.xpose.msra.mxu0 0
        %520 = vmatprep.subr.bf16.mxu0 0
        %521 = vmatpush1.bf16.xpose.msra.mxu0 0
        %522 = vmatprep.subr.bf16.mxu0 0
        %523 = vmatpush1.bf16.xpose.msra.mxu0 0
        %524 = vmatprep.subr.bf16.mxu0 0
        %525 = vmatpush1.bf16.xpose.msra.mxu0 0
        %526 = vmatprep.subr.bf16.mxu0 0
        %527 = vmatpush1.bf16.xpose.msra.mxu0 0
        %528 = vmatprep.subr.bf16.mxu0 0
        %529 = vmatpush1.bf16.xpose.msra.mxu0 0
        %530 = vmatprep.subr.bf16.mxu0 0
        %531 = vmatpush1.bf16.xpose.msra.mxu0 %v514
        %532 = vmatprep.subr.bf16.mxu0 0
        %533 = vmatpush2.bf16.xpose.msra.mxu0 0
        %534 = vmatprep.subr.bf16.mxu0 0
        %535 = vmatpush2.bf16.xpose.msra.mxu0 0
        %536 = vmatprep.subr.bf16.mxu0 0
        %537 = vmatpush2.bf16.xpose.msra.mxu0 0
        %538 = vmatprep.subr.bf16.mxu0 0
        %539 = vmatpush2.bf16.xpose.msra.mxu0 0
        %540 = vmatprep.subr.bf16.mxu0 0
        %541 = vmatpush2.bf16.xpose.msra.mxu0 0
        %542 = vmatprep.subr.bf16.mxu0 0
        %543 = vmatpush2.bf16.xpose.msra.mxu0 0
        %544 = vmatprep.subr.bf16.mxu0 0
        %545 = vmatpush2.bf16.xpose.msra.mxu0 0
        %546 = vmatprep.subr.bf16.mxu0 0
        %547 = vmatpush2.bf16.xpose.msra.mxu0 0
        %548 = vmatprep.mubr.bf16.mxu0 0
        %549 = vmatmul.mubr.bf16.gmra.mxu0 %v511
        %v550 = vpop.f32.mrf.mxu0
        %v551 = vadd.f32 0.0, %v550
        %v552 = vpop.f32.mrf.mxu0
        %v553 = vpop.f32.mrf.mxu0
        %v554 = vpop.f32.mrf.mxu0
        %555 = vdwg.mxu0
        %v556 = vmul.f32 %v551, 0.17677669
        %vm557 = vcmask 64512
        %v558 = vsel %vm557, %v556, -inf
        %559 = vmax.xlane.f32.xlu0 %v558
        %v560 = vpop.xlane.xlu0 %559
        %v561 = vsub.f32 %v556, %v560
        %v562 = vmul.f32 %v561, 1.442695
        %v563 = vpow.pop %v562
        %v564 = vsel %vm557, %v563, 0.0
        %565 = vadd.xlane.f32.xlu0 %v564
        %v566 = vpop.xlane.xlu0 %565
        %v567 = vrcp.pop %v566
        %v568 = vmul.f32 %v563, %v567
        %v569 = vmul.f32 %v501, 5.0
        %v570 = vxor.u32 %v569, 2147483648
        %v571 = vmul.f32 %v570, 1.442695
        %v572 = vpow.pop %v571
        %v573 = vadd.f32 %v572, 1.0
        %v574 = vrcp.pop %v573
        %v575 = vmul.f32 1.0, %v574
        %v576 = vadd.f32 %v575, 1e-05
        %v577 = vmul.f32 %v576, 1.0986123
        %v578 = vmul.f32 %v577, 1.442695
        %v579 = vpow.pop %v578
        %v580 = vsub.f32 %v579, 1.0
        %v581 = vrcp.pop %v580
        %v582 = vld [vmem:[%s0] sm:$0xff]
        %v583 = vmul.f32 %v581, 0.3989423
        %v584 = vmul.f32 %v581, %v581
        %586 = vset.pattern.permute.xlu0 96
        %587 = vperm.xlu0 %586, %v584
        %v588 = vpop.permute.xlu0 %587
        %v590 = vmul.f32 %v582, %v588
        %v591 = vmul.f32 %v590, 1.442695
        %v592 = vpow.pop %v591
        %594 = vset.pattern.permute.xlu0 96
        %595 = vperm.xlu0 %594, %v583
        %v596 = vpop.permute.xlu0 %595
        %v598 = vmul.f32 %v596, %v592
        %vm599 = vcmp.eq.f32.partialorder %v582, 0.0
        %v600 = vsel %vm599, 1, 0
        %v601 = vcvt.s32.f32 %v600
        %603 = vset.pattern.permute.xlu0 96
        %604 = vperm.xlu0 %603, %v580
        %v605 = vpop.permute.xlu0 %604
        %v607 = vmul.f32 %v605, %v601
        %v608 = vsel %vm557, %v607, 0.0
        %v609 = vrot.slane %v608, 4
        %v610 = vadd.f32 %v608, %v609
        %v611 = vrot.slane %v610, 2
        %v612 = vadd.f32 %v610, %v611
        %v613 = vrot.slane %v612, 1
        %v614 = vadd.f32 %v612, %v613
        %v615 = vpack.c.bf16 %v568, %v568
        %616 = vrot.lane.b32.xlu0 %v506, 64
        %v617 = vpop.permute.xlu0 %616
        %v619 = vsel %vm557, %v615, 0
        %vm621 = vcmask 1043456
        %v623 = vsel %vm621, %v617, 0
        %625 = vmatprep.subr.bf16.mxu0 0
        %626 = vmatpush1.bf16.msra.mxu0 0
        %627 = vmatprep.subr.bf16.mxu0 0
        %628 = vmatpush1.bf16.msra.mxu0 0
        %629 = vmatprep.subr.bf16.mxu0 0
        %630 = vmatpush1.bf16.msra.mxu0 0
        %631 = vmatprep.subr.bf16.mxu0 0
        %632 = vmatpush1.bf16.msra.mxu0 0
        %633 = vmatprep.subr.bf16.mxu0 0
        %634 = vmatpush1.bf16.msra.mxu0 0
        %635 = vmatprep.subr.bf16.mxu0 0
        %636 = vmatpush1.bf16.msra.mxu0 0
        %637 = vmatprep.subr.bf16.mxu0 0
        %638 = vmatpush1.bf16.msra.mxu0 0
        %639 = vmatprep.subr.bf16.mxu0 0
        %640 = vmatpush1.bf16.msra.mxu0 %v623
        %641 = vmatprep.subr.bf16.mxu0 0
        %642 = vmatpush2.bf16.msra.mxu0 0
        %643 = vmatprep.subr.bf16.mxu0 0
        %644 = vmatpush2.bf16.msra.mxu0 0
        %645 = vmatprep.subr.bf16.mxu0 0
        %646 = vmatpush2.bf16.msra.mxu0 0
        %647 = vmatprep.subr.bf16.mxu0 0
        %648 = vmatpush2.bf16.msra.mxu0 0
        %649 = vmatprep.subr.bf16.mxu0 0
        %650 = vmatpush2.bf16.msra.mxu0 0
        %651 = vmatprep.subr.bf16.mxu0 0
        %652 = vmatpush2.bf16.msra.mxu0 0
        %653 = vmatprep.subr.bf16.mxu0 0
        %654 = vmatpush2.bf16.msra.mxu0 0
        %655 = vmatprep.subr.bf16.mxu0 0
        %656 = vmatpush2.bf16.msra.mxu0 0
        %657 = vmatprep.mubr.bf16.mxu0 0
        %658 = vmatmul.mubr.bf16.gmra.mxu0 %v619
        %v659 = vpop.f32.mrf.mxu0
        %v660 = vadd.f32 0.0, %v659
        %v661 = vpop.f32.mrf.mxu0
        %v662 = vpop.f32.mrf.mxu0
        %v663 = vpop.f32.mrf.mxu0
        %664 = vdwg.mxu0
        %v665 = vld [vmem:[%s8] sm:$0x1]
        %v666 = vpack.c.bf16 %v660, %v660
        %v667 = vld [vmem:[%s4] sm:$0xf]
        %v668 = vld [vmem:[%s4 + $0x4] sm:$0xf]
        %v669 = vld [vmem:[%s4 + $0x8] sm:$0xf]
        %v670 = vld [vmem:[%s4 + $0xc] sm:$0xf]
        %v671 = vlaneseq
        %v672 = vshrl.u32 %v671, 7
        %v673 = vsub.s32 0, %v672
        %v674 = vrot.slane %v665, %v673
        %v679 = vunpack.c.l.b16 %v667
        %v680 = vunpack.c.l.b16 %v668
        %v681 = vunpack.c.l.b16 %v669
        %v682 = vunpack.c.l.b16 %v670
        %v683 = vpack.c.b16 %v680, %v679
        %v684 = vpack.c.b16 %v682, %v681
        %v688 = vsel %vm462, %v666, 0
        %690 = vmatprep.subr.bf16.mxu0 0
        %691 = vmatpush1.bf16.msra.mxu0 0
        %692 = vmatprep.subr.bf16.mxu0 0
        %693 = vmatpush1.bf16.msra.mxu0 0
        %694 = vmatprep.subr.bf16.mxu0 0
        %695 = vmatpush1.bf16.msra.mxu0 0
        %696 = vmatprep.subr.bf16.mxu0 0
        %697 = vmatpush1.bf16.msra.mxu0 0
        %698 = vmatprep.subr.bf16.mxu0 0
        %699 = vmatpush1.bf16.msra.mxu0 0
        %700 = vmatprep.subr.bf16.mxu0 0
        %701 = vmatpush1.bf16.msra.mxu0 0
        %702 = vmatprep.subr.bf16.mxu0 0
        %703 = vmatpush1.bf16.msra.mxu0 %v684
        %704 = vmatprep.subr.bf16.mxu0 0
        %705 = vmatpush1.bf16.msra.mxu0 %v683
        %706 = vmatprep.subr.bf16.mxu0 0
        %707 = vmatpush2.bf16.msra.mxu0 0
        %708 = vmatprep.subr.bf16.mxu0 0
        %709 = vmatpush2.bf16.msra.mxu0 0
        %710 = vmatprep.subr.bf16.mxu0 0
        %711 = vmatpush2.bf16.msra.mxu0 0
        %712 = vmatprep.subr.bf16.mxu0 0
        %713 = vmatpush2.bf16.msra.mxu0 0
        %714 = vmatprep.subr.bf16.mxu0 0
        %715 = vmatpush2.bf16.msra.mxu0 0
        %716 = vmatprep.subr.bf16.mxu0 0
        %717 = vmatpush2.bf16.msra.mxu0 0
        %718 = vmatprep.subr.bf16.mxu0 0
        %719 = vmatpush2.bf16.msra.mxu0 0
        %720 = vmatprep.subr.bf16.mxu0 0
        %721 = vmatpush2.bf16.msra.mxu0 0
        %722 = vmatprep.mubr.bf16.mxu0 0
        %723 = vmatmul.mubr.bf16.gmra.mxu0 %v688
        %v724 = vpop.f32.mrf.mxu0
        %v725 = vadd.f32 %v674, %v724
        %v726 = vpop.f32.mrf.mxu0
        %v727 = vpop.f32.mrf.mxu0
        %v728 = vpop.f32.mrf.mxu0
        %729 = vdwg.mxu0
        %v730 = vld [vmem:[%s8 + $0x1] sm:$0x1]
        %v731 = vld [vmem:[%s8 + $0x2] sm:$0x1]
        %v732 = vld [vmem:[%s8 + $0x3] sm:$0x1]
        %v733 = vld [vmem:[%s8 + $0x4] sm:$0x1]
        %v734 = vld [vmem:[%s8 + $0x5] sm:$0x1]
        %v735 = vadd.f32 %v437, %v725
        %v736 = vsel %vm462, %v735, 0.0
        %737 = vadd.xlane.f32.xlu0 %v736
        %v738 = vpop.xlane.xlu0 %737
        %v739 = vrcp.pop 32.0
        %v740 = vmul.f32 %v738, %v739
        %v741 = vsub.f32 %v735, %v740
        %v742 = vmul.f32 %v741, %v741
        %v743 = vsel %vm462, %v742, 0.0
        %744 = vadd.xlane.f32.xlu0 %v743
        %v745 = vpop.xlane.xlu0 %744
        %v746 = vmul.f32 %v745, %v739
        %v747 = vadd.f32 %v746, 1e-05
        %v748 = vrsqrt.pop %v747
        %v749 = vmul.f32 %v741, %v748
        %v750 = vlaneseq
        %v751 = vshrl.u32 %v750, 7
        %v752 = vsub.s32 0, %v751
        %v753 = vrot.slane %v731, %v752
        %v754 = vmul.f32 %v749, %v753
        %v755 = vlaneseq
        %v756 = vshrl.u32 %v755, 7
        %v757 = vsub.s32 0, %v756
        %v758 = vrot.slane %v732, %v757
        %v759 = vadd.f32 %v754, %v758
        %v760 = vpack.c.bf16 %v759, %v759
        %v761 = vld [vmem:[%s5] sm:$0xf]
        %v762 = vld [vmem:[%s5 + $0x4] sm:$0xf]
        %v763 = vld [vmem:[%s5 + $0x8] sm:$0xf]
        %v764 = vld [vmem:[%s5 + $0xc] sm:$0xf]
        %v765 = vld [vmem:[%s6] sm:$0x1]
        %v767 = vlaneseq
        %v768 = vshrl.u32 %v767, 7
        %v769 = vsub.s32 0, %v768
        %v770 = vrot.slane %v765, %v769
        %v776 = vunpack.c.l.b16 %v761
        %v777 = vunpack.c.l.b16 %v762
        %v778 = vunpack.c.l.b16 %v763
        %v779 = vunpack.c.l.b16 %v764
        %v780 = vpack.c.b16 %v777, %v776
        %v781 = vpack.c.b16 %v779, %v778
        %v785 = vsel %vm462, %v760, 0
        %787 = vmatprep.subr.bf16.mxu0 0
        %788 = vmatpush1.bf16.msra.mxu0 0
        %789 = vmatprep.subr.bf16.mxu0 0
        %790 = vmatpush1.bf16.msra.mxu0 0
        %791 = vmatprep.subr.bf16.mxu0 0
        %792 = vmatpush1.bf16.msra.mxu0 0
        %793 = vmatprep.subr.bf16.mxu0 0
        %794 = vmatpush1.bf16.msra.mxu0 0
        %795 = vmatprep.subr.bf16.mxu0 0
        %796 = vmatpush1.bf16.msra.mxu0 0
        %797 = vmatprep.subr.bf16.mxu0 0
        %798 = vmatpush1.bf16.msra.mxu0 0
        %799 = vmatprep.subr.bf16.mxu0 0
        %800 = vmatpush1.bf16.msra.mxu0 %v781
        %801 = vmatprep.subr.bf16.mxu0 0
        %802 = vmatpush1.bf16.msra.mxu0 %v780
        %803 = vmatprep.subr.bf16.mxu0 0
        %804 = vmatpush2.bf16.msra.mxu0 0
        %805 = vmatprep.subr.bf16.mxu0 0
        %806 = vmatpush2.bf16.msra.mxu0 0
        %807 = vmatprep.subr.bf16.mxu0 0
        %808 = vmatpush2.bf16.msra.mxu0 0
        %809 = vmatprep.subr.bf16.mxu0 0
        %810 = vmatpush2.bf16.msra.mxu0 0
        %811 = vmatprep.subr.bf16.mxu0 0
        %812 = vmatpush2.bf16.msra.mxu0 0
        %813 = vmatprep.subr.bf16.mxu0 0
        %814 = vmatpush2.bf16.msra.mxu0 0
        %815 = vmatprep.subr.bf16.mxu0 0
        %816 = vmatpush2.bf16.msra.mxu0 0
        %817 = vmatprep.subr.bf16.mxu0 0
        %818 = vmatpush2.bf16.msra.mxu0 0
        %819 = vmatprep.mubr.bf16.mxu0 0
        %820 = vmatmul.mubr.bf16.gmra.mxu0 %v785
        %v821 = vpop.f32.mrf.mxu0
        %v822 = vadd.f32 %v770, %v821
        %v823 = vpop.f32.mrf.mxu0
        %v824 = vpop.f32.mrf.mxu0
        %v825 = vpop.f32.mrf.mxu0
        %826 = vdwg.mxu0
        %v827 = vmax.f32 %v822, 0.0
        %v828 = vpack.c.bf16 %v827, %v827
        %v829 = vld [vmem:[%s7] sm:$0xf]
        %v830 = vld [vmem:[%s7 + $0x4] sm:$0xf]
        %v831 = vld [vmem:[%s7 + $0x8] sm:$0xf]
        %v832 = vld [vmem:[%s7 + $0xc] sm:$0xf]
        %v833 = vld [vmem:[%s7 + $0x10] sm:$0xf]
        %v834 = vld [vmem:[%s7 + $0x14] sm:$0xf]
        %v835 = vld [vmem:[%s7 + $0x18] sm:$0xf]
        %v836 = vld [vmem:[%s7 + $0x1c] sm:$0xf]
        %v837 = vld [vmem:[%s7 + $0x20] sm:$0xf]
        %v838 = vld [vmem:[%s7 + $0x24] sm:$0xf]
        %v839 = vld [vmem:[%s7 + $0x28] sm:$0xf]
        %v840 = vld [vmem:[%s7 + $0x2c] sm:$0xf]
        %v841 = vld [vmem:[%s7 + $0x30] sm:$0xf]
        %v842 = vld [vmem:[%s7 + $0x34] sm:$0xf]
        %v843 = vld [vmem:[%s7 + $0x38] sm:$0xf]
        %v844 = vld [vmem:[%s7 + $0x3c] sm:$0xf]
        %v845 = vlaneseq
        %v846 = vshrl.u32 %v845, 7
        %v847 = vsub.s32 0, %v846
        %v848 = vrot.slane %v730, %v847
        %v865 = vunpack.c.l.b16 %v829
        %v866 = vunpack.c.l.b16 %v830
        %v867 = vunpack.c.l.b16 %v831
        %v868 = vunpack.c.l.b16 %v832
        %v869 = vunpack.c.l.b16 %v833
        %v870 = vunpack.c.l.b16 %v834
        %v871 = vunpack.c.l.b16 %v835
        %v872 = vunpack.c.l.b16 %v836
        %v873 = vunpack.c.l.b16 %v837
        %v874 = vunpack.c.l.b16 %v838
        %v875 = vunpack.c.l.b16 %v839
        %v876 = vunpack.c.l.b16 %v840
        %v877 = vunpack.c.l.b16 %v841
        %v878 = vunpack.c.l.b16 %v842
        %v879 = vunpack.c.l.b16 %v843
        %v880 = vunpack.c.l.b16 %v844
        %v881 = vpack.c.b16 %v866, %v865
        %v882 = vpack.c.b16 %v868, %v867
        %v883 = vpack.c.b16 %v870, %v869
        %v884 = vpack.c.b16 %v872, %v871
        %v885 = vpack.c.b16 %v874, %v873
        %v886 = vpack.c.b16 %v876, %v875
        %v887 = vpack.c.b16 %v878, %v877
        %v888 = vpack.c.b16 %v880, %v879
        %897 = vmatprep.subr.bf16.mxu0 0
        %898 = vmatpush1.bf16.msra.mxu0 %v888
        %899 = vmatprep.subr.bf16.mxu0 0
        %900 = vmatpush1.bf16.msra.mxu0 %v887
        %901 = vmatprep.subr.bf16.mxu0 0
        %902 = vmatpush1.bf16.msra.mxu0 %v886
        %903 = vmatprep.subr.bf16.mxu0 0
        %904 = vmatpush1.bf16.msra.mxu0 %v885
        %905 = vmatprep.subr.bf16.mxu0 0
        %906 = vmatpush1.bf16.msra.mxu0 %v884
        %907 = vmatprep.subr.bf16.mxu0 0
        %908 = vmatpush1.bf16.msra.mxu0 %v883
        %909 = vmatprep.subr.bf16.mxu0 0
        %910 = vmatpush1.bf16.msra.mxu0 %v882
        %911 = vmatprep.subr.bf16.mxu0 0
        %912 = vmatpush1.bf16.msra.mxu0 %v881
        %913 = vmatprep.subr.bf16.mxu0 0
        %914 = vmatpush2.bf16.msra.mxu0 0
        %915 = vmatprep.subr.bf16.mxu0 0
        %916 = vmatpush2.bf16.msra.mxu0 0
        %917 = vmatprep.subr.bf16.mxu0 0
        %918 = vmatpush2.bf16.msra.mxu0 0
        %919 = vmatprep.subr.bf16.mxu0 0
        %920 = vmatpush2.bf16.msra.mxu0 0
        %921 = vmatprep.subr.bf16.mxu0 0
        %922 = vmatpush2.bf16.msra.mxu0 0
        %923 = vmatprep.subr.bf16.mxu0 0
        %924 = vmatpush2.bf16.msra.mxu0 0
        %925 = vmatprep.subr.bf16.mxu0 0
        %926 = vmatpush2.bf16.msra.mxu0 0
        %927 = vmatprep.subr.bf16.mxu0 0
        %928 = vmatpush2.bf16.msra.mxu0 0
        %929 = vmatprep.mubr.bf16.mxu0 0
        %930 = vmatmul.mubr.bf16.gmra.mxu0 %v828
        %v931 = vpop.f32.mrf.mxu0
        %v932 = vadd.f32 %v848, %v931
        %v933 = vpop.f32.mrf.mxu0
        %v934 = vpop.f32.mrf.mxu0
        %v935 = vpop.f32.mrf.mxu0
        %936 = vdwg.mxu0
        %v937 = vadd.f32 %v759, %v932
        %v938 = vsel %vm462, %v937, 0.0
        %939 = vadd.xlane.f32.xlu0 %v938
        %v940 = vpop.xlane.xlu0 %939
        %v941 = vmul.f32 %v940, %v739
        %v942 = vsub.f32 %v937, %v941
        %v943 = vmul.f32 %v942, %v942
        %v944 = vsel %vm462, %v943, 0.0
        %945 = vadd.xlane.f32.xlu0 %v944
        %v946 = vpop.xlane.xlu0 %945
        %v947 = vmul.f32 %v946, %v739
        %v948 = vadd.f32 %v947, 1e-05
        %v949 = vrsqrt.pop %v948
        %v950 = vmul.f32 %v942, %v949
        %v951 = vlaneseq
        %v952 = vshrl.u32 %v951, 7
        %v953 = vsub.s32 0, %v952
        %v954 = vrot.slane %v733, %v953
        %v955 = vmul.f32 %v950, %v954
        %v956 = vlaneseq
        %v957 = vshrl.u32 %v956, 7
        %v958 = vsub.s32 0, %v957
        %v959 = vrot.slane %v734, %v958
        %v960 = vadd.f32 %v955, %v959
        %961 = vst.msk [vmem:[%s411] sm:$0xff] %vm462, %v960
        %962 = vst.msk [vmem:[%s418] sm:$0xff] %vm557, %v568
        %963 = vst.msk [vmem:[%s425] sm:$0xff] %vm557, %v598
        %vm964 = vcmask 57344
        %965 = vst.msk [vmem:[%s431] sm:$0x1] %vm964, %v614
        %s966 = sand.u32 %s235, 1
        %s967 = scalar_lea.sflag [#allocation3], %s966
        %s968 = sand.u32 %s235, 1
        %s969 = smul.addr %s968, 8
        %s970 = scalar_lea.vmem [#allocation2], %s969
        %s971 = sand.u32 %s33, 1
        %s972 = scalar_lea.sflag [#allocation5], %s971
        %s973 = sand.u32 %s261, 1
        %s974 = smul.addr %s973, 8
        %s975 = scalar_lea.vmem [#allocation4], %s974
        %s976 = sand.u32 %s33, 1
        %s977 = scalar_lea.sflag [#allocation5], %s976
        %s978 = sand.u32 %s287, 1
        %s979 = smul.addr %s978, 8
        %s980 = scalar_lea.vmem [#allocation6], %s979
        %s981 = sand.u32 %s313, 1
        %s982 = scalar_lea.sflag [#allocation8], %s981
        %s983 = sand.u32 %s313, 1
        %s984 = scalar_lea.vmem [#allocation7], %s983
        // Predicated region
        $region57: #{tpu_custom_call.1} parent=55 // pred_check
          %p985 = pneg %p245
        $region58: #{tpu_custom_call.1} parent=55 // pred_check_branch
          %987 = sbr.rel (%p985) target = $region60
        $region59: #{tpu_custom_call.1} parent=55 // pred_region
          %s989 = ssub.s32 128, 128
          %990 = vsyncadd %s967, %s989
          %s991 = smul.addr %s33, 128
          %s992 = scalar_lea.hbm %s9, %s991
          %s994 = sshll.u32 %s970, 4
          %s995 = int_to_ptr.vmem [resolvable:$true] %s994
          %997 = dma.vmem_to_hbm [thread:$0]  %s995, 128, %s992, %s967
        $region60: #{tpu_custom_call.1} parent=55 // pred_fallthru
          _
        // Predicated region
        $region61: #{tpu_custom_call.1} parent=55 // pred_check
          %p998 = pneg %p271
        $region62: #{tpu_custom_call.1} parent=55 // pred_check_branch
          %1000 = sbr.rel (%p998) target = $region64
        $region63: #{tpu_custom_call.1} parent=55 // pred_region
          %s1002 = ssub.s32 128, 128
          %1003 = vsyncadd %s972, %s1002
          %s1004 = smul.addr %s33, 128
          %s1005 = scalar_lea.hbm %s10, %s1004
          %s1007 = sshll.u32 %s975, 4
          %s1008 = int_to_ptr.vmem [resolvable:$true] %s1007
          %1010 = dma.vmem_to_hbm [thread:$0]  %s1008, 128, %s1005, %s972
        $region64: #{tpu_custom_call.1} parent=55 // pred_fallthru
          _
        // Predicated region
        $region65: #{tpu_custom_call.1} parent=55 // pred_check
          %p1011 = pneg %p297
        $region66: #{tpu_custom_call.1} parent=55 // pred_check_branch
          %1013 = sbr.rel (%p1011) target = $region68
        $region67: #{tpu_custom_call.1} parent=55 // pred_region
          %s1015 = ssub.s32 128, 128
          %1016 = vsyncadd %s977, %s1015
          %s1017 = smul.addr %s33, 128
          %s1018 = scalar_lea.hbm %s11, %s1017
          %s1020 = sshll.u32 %s980, 4
          %s1021 = int_to_ptr.vmem [resolvable:$true] %s1020
          %1023 = dma.vmem_to_hbm [thread:$0]  %s1021, 128, %s1018, %s977
        $region68: #{tpu_custom_call.1} parent=55 // pred_fallthru
          _
        // Predicated region
        $region69: #{tpu_custom_call.1} parent=55 // pred_check
          %p1024 = pneg %p323
        $region70: #{tpu_custom_call.1} parent=55 // pred_check_branch
          %1026 = sbr.rel (%p1024) target = $region72
        $region71: #{tpu_custom_call.1} parent=55 // pred_region
          %s1028 = ssub.s32 16, 16
          %1029 = vsyncadd %s982, %s1028
          %s1030 = smul.addr %s33, 16
          %s1031 = scalar_lea.hbm %s12, %s1030
          %s1033 = sshll.u32 %s984, 4
          %s1034 = int_to_ptr.vmem [resolvable:$true] %s1033
          %1036 = dma.vmem_to_hbm [thread:$0]  %s1034, 16, %s1031, %s982
        $region72: #{tpu_custom_call.1} parent=55 // pred_fallthru
          _
      $region56: #{tpu_custom_call.1} parent=5 // pred_fallthru
        _
      %p1037 = scmp.le.s32.totalorder 2, %s28
      // Predicated region
      $region73: #{tpu_custom_call.1} parent=5 // pred_check
        %p1038 = pneg %p1037
      $region74: #{tpu_custom_call.1} parent=5 // pred_check_branch
        %1040 = sbr.rel (%p1038) target = $region76
      $region75: #{tpu_custom_call.1} parent=5 // pred_region
        %s1041 = ssub.s32 %s28, 2
        // Predicated region
        $region77: #{tpu_custom_call.1} parent=75 // pred_check
          %p1042 = pneg %p251
        $region78: #{tpu_custom_call.1} parent=75 // pred_check_branch
          %1044 = sbr.rel (%p1042) target = $region80
        $region79: #{tpu_custom_call.1} parent=75 // pred_region
          %s1045 = sand.u32 %s236, 1
          %s1046 = scalar_lea.sflag [#allocation3], %s1045
          %s1047 = sand.u32 %s236, 1
          %s1048 = smul.addr %s1047, 8
          %s1049 = scalar_lea.vmem [#allocation2], %s1048
          %1050 = dma.done %s1046, 128
        $region80: #{tpu_custom_call.1} parent=75 // pred_fallthru
          _
        // Predicated region
        $region81: #{tpu_custom_call.1} parent=75 // pred_check
          %p1051 = pneg %p277
        $region82: #{tpu_custom_call.1} parent=75 // pred_check_branch
          %1053 = sbr.rel (%p1051) target = $region84
        $region83: #{tpu_custom_call.1} parent=75 // pred_region
          %s1054 = sand.u32 %s34, 1
          %s1055 = scalar_lea.sflag [#allocation5], %s1054
          %s1056 = sand.u32 %s262, 1
          %s1057 = smul.addr %s1056, 8
          %s1058 = scalar_lea.vmem [#allocation4], %s1057
          %1059 = dma.done %s1055, 128
        $region84: #{tpu_custom_call.1} parent=75 // pred_fallthru
          _
        // Predicated region
        $region85: #{tpu_custom_call.1} parent=75 // pred_check
          %p1060 = pneg %p303
        $region86: #{tpu_custom_call.1} parent=75 // pred_check_branch
          %1062 = sbr.rel (%p1060) target = $region88
        $region87: #{tpu_custom_call.1} parent=75 // pred_region
          %s1063 = sand.u32 %s34, 1
          %s1064 = scalar_lea.sflag [#allocation5], %s1063
          %s1065 = sand.u32 %s288, 1
          %s1066 = smul.addr %s1065, 8
          %s1067 = scalar_lea.vmem [#allocation6], %s1066
          %1068 = dma.done %s1064, 128
        $region88: #{tpu_custom_call.1} parent=75 // pred_fallthru
          _
        // Predicated region
        $region89: #{tpu_custom_call.1} parent=75 // pred_check
          %p1069 = pneg %p329
        $region90: #{tpu_custom_call.1} parent=75 // pred_check_branch
          %1071 = sbr.rel (%p1069) target = $region92
        $region91: #{tpu_custom_call.1} parent=75 // pred_region
          %s1072 = sand.u32 %s314, 1
          %s1073 = scalar_lea.sflag [#allocation8], %s1072
          %s1074 = sand.u32 %s314, 1
          %s1075 = scalar_lea.vmem [#allocation7], %s1074
          %1076 = dma.done %s1073, 16
        $region92: #{tpu_custom_call.1} parent=75 // pred_fallthru
          _
      $region76: #{tpu_custom_call.1} parent=5 // pred_fallthru
        _
    $region6: #{tpu_custom_call.1} parent=1 // loop_footer
      %s32 = sadd.s32 1, %s28
    $region7: #{tpu_custom_call.1} parent=1 // loop_footer_branch
      %27 = sbr.rel target = $region3
    $region8: #{tpu_custom_call.1} parent=1 // loop_exit
      _
    %1077 = vsyncpa [#allocation3], 1
    %s1078 = scalar_lea.sflag [#allocation3], 1
    %1079 = vsyncpa %s1078, 1
    %1080 = vsyncpa [#allocation5], 1
    %s1081 = scalar_lea.sflag [#allocation5], 1
    %1082 = vsyncpa %s1081, 1
    %1083 = vsyncpa [#allocation8], 1
    %s1084 = scalar_lea.sflag [#allocation8], 1
    %1085 = vsyncpa %s1084, 1

</llo_original>
